<compile_context>
chip_gen: v7x
topology: tpu7x:2x2x1
jax: 0.10.0
libtpu: 0.0.40
codegen_flags: <defaults>
</compile_context>

<pallas_src>
import functools

import jax
import jax.numpy as jnp
from jax.experimental import pallas as pl
from jax.experimental.pallas import tpu as pltpu


# ---------------------------------------------------------------------------
# Pass 0: dinv = rsqrt(rowsum(A) + 1), row-tiled.
# ---------------------------------------------------------------------------
def _dinv_kernel(a_ref, dinv_ref):
    a = a_ref[...].astype(jnp.float32)                      # (tm, N)
    deg = jnp.sum(a, axis=1, keepdims=True) + 1.0           # +1 = folded self-loop
    dinv_ref[...] = jax.lax.rsqrt(deg)                      # (tm, 1)


# ---------------------------------------------------------------------------
# Pass 1: H1 = relu((S @ X) @ W1 + b1) for one row tile of S.
# ---------------------------------------------------------------------------
def _layer1_kernel(a_ref, dr_ref, dc_ref, x_full_ref, x_rows_ref, w1_ref,
                   b1_ref, h1_ref, *, mm_dtype):
    dr = dr_ref[...]                                         # (tm, 1) f32, dinv[tile rows]
    dc = dc_ref[...]                                         # (1, N)  f32, dinv[all cols]
    a = a_ref[...].astype(jnp.float32)                       # (tm, N)
    sa = (dr * a) * dc                                       # scaled adjacency, no self-loop

    x_full = x_full_ref[...].astype(jnp.float32)             # (N, F), resident
    x_rows = x_rows_ref[...].astype(jnp.float32)             # (tm, F)

    # S @ X  =  sa @ X  +  dinv^2 ⊙ X[rows]   (self-loop diagonal correction)
    sx = jnp.dot(sa.astype(mm_dtype), x_full.astype(mm_dtype),
                 preferred_element_type=jnp.float32)
    sx = sx + (dr * dr) * x_rows                             # (tm, F) f32

    # (S @ X) @ W1 — reassociated (cheaper when nfeat <= nhid).
    # TODO(synk): when nfeat >> nhid (e.g. Cora-like features), pre-project X@W1 in a
    # separate tiled matmul and feed it here instead of X, skipping this projection.
    h = jnp.dot(sx.astype(mm_dtype), w1_ref[...].astype(mm_dtype),
                preferred_element_type=jnp.float32)
    h = jnp.maximum(h + b1_ref[...].astype(jnp.float32), 0.0)   # ReLU in f32 (VPU)
    h1_ref[...] = h.astype(h1_ref.dtype)


# ---------------------------------------------------------------------------
# Pass 2: out = log_softmax(((S @ H1) @ W2 + b2) @ W3 + b3) for one row tile.
# ---------------------------------------------------------------------------
def _layer2_kernel(a_ref, dr_ref, dc_ref, h1_full_ref, h1_rows_ref, w2_ref,
                   b2_ref, w3_ref, b3_ref, out_ref, *, mm_dtype):
    dr = dr_ref[...]                                         # (tm, 1)
    dc = dc_ref[...]                                         # (1, N)
    a = a_ref[...].astype(jnp.float32)
    sa = (dr * a) * dc

    h1_full = h1_full_ref[...]                               # (N, nhid), resident
    h1_rows = h1_rows_ref[...].astype(jnp.float32)           # (tm, nhid)

    # S @ H1 with self-loop diagonal correction
    sh = jnp.dot(sa.astype(mm_dtype), h1_full.astype(mm_dtype),
                 preferred_element_type=jnp.float32)
    sh = sh + (dr * dr) * h1_rows                            # (tm, nhid) f32

    # (S @ H1) @ W2  (== S @ (H1 @ W2); no redundant per-tile H1@W2)
    h2 = jnp.dot(sh.astype(mm_dtype), w2_ref[...].astype(mm_dtype),
                 preferred_element_type=jnp.float32) + b2_ref[...].astype(jnp.float32)

    # output Linear
    logits = jnp.dot(h2.astype(mm_dtype), w3_ref[...].astype(mm_dtype),
                     preferred_element_type=jnp.float32) + b3_ref[...].astype(jnp.float32)

    # log_softmax over classes — f32 VPU/EUP math
    m = jnp.max(logits, axis=-1, keepdims=True)
    z = logits - m
    lse = jnp.log(jnp.sum(jnp.exp(z), axis=-1, keepdims=True))
    out_ref[...] = (z - lse).astype(out_ref.dtype)


# ---------------------------------------------------------------------------
# Wrapper
# ---------------------------------------------------------------------------
def cog_forward(adj, x, params, *, tm=128, matmul_dtype=jnp.bfloat16):
    """Dense equivalent of CoG.forward(x, adj) in eval mode (n_real = N)."""
    n, nfeat = x.shape
    nhid = params["w1"].shape[1]
    nclass = params["w3"].shape[1]

    # Row-tile size: multiple of 8 (sublane) or the full extent.
    tm = min(tm, n)
    if tm != n and tm % 8 != 0:
        tm = max(8, (tm // 8) * 8)
    grid = (pl.cdiv(n, tm),)

    cparams = pltpu.CompilerParams(
        dimension_semantics=("parallel",),          # rows are independent -> v7x dual-TC
        vmem_limit_bytes=32 * 1024 * 1024,
    )

    # ---- pass 0: dinv ----------------------------------------------------
    dinv_col = pl.pallas_call(
        _dinv_kernel,
        out_shape=jax.ShapeDtypeStruct((n, 1), jnp.float32),
        grid=grid,
        in_specs=[pl.BlockSpec((tm, n), lambda i: (i, 0))],
        out_specs=pl.BlockSpec((tm, 1), lambda i: (i, 0)),
        compiler_params=cparams,
    )(adj)
    # Lane-dense copy of dinv for column scaling (layout plumbing, not compute).
    dinv_row = dinv_col.reshape(1, n)

    # ---- pass 1: H1 --------------------------------------------------------
    h1 = pl.pallas_call(
        functools.partial(_layer1_kernel, mm_dtype=matmul_dtype),
        out_shape=jax.ShapeDtypeStruct((n, nhid), matmul_dtype),
        grid=grid,
        in_specs=[
            pl.BlockSpec((tm, n), lambda i: (i, 0)),       # A row tile
            pl.BlockSpec((tm, 1), lambda i: (i, 0)),       # dinv[rows]
            pl.BlockSpec((1, n), lambda i: (0, 0)),        # dinv (all cols), resident
            pl.BlockSpec((n, nfeat), lambda i: (0, 0)),    # X, resident
            pl.BlockSpec((tm, nfeat), lambda i: (i, 0)),   # X[rows] (diag correction)
            pl.BlockSpec((nfeat, nhid), lambda i: (0, 0)), # W1
            pl.BlockSpec((1, nhid), lambda i: (0, 0)),     # b1
        ],
        out_specs=pl.BlockSpec((tm, nhid), lambda i: (i, 0)),
        compiler_params=cparams,
    )(adj, dinv_col, dinv_row, x, x, params["w1"], params["b1"])

    # ---- pass 2: logits + log_softmax --------------------------------------
    out = pl.pallas_call(
        functools.partial(_layer2_kernel, mm_dtype=matmul_dtype),
        out_shape=jax.ShapeDtypeStruct((n, nclass), jnp.float32),
        grid=grid,
        in_specs=[
            pl.BlockSpec((tm, n), lambda i: (i, 0)),        # A row tile
            pl.BlockSpec((tm, 1), lambda i: (i, 0)),        # dinv[rows]
            pl.BlockSpec((1, n), lambda i: (0, 0)),         # dinv (all cols), resident
            pl.BlockSpec((n, nhid), lambda i: (0, 0)),      # H1, resident
            pl.BlockSpec((tm, nhid), lambda i: (i, 0)),     # H1[rows]
            pl.BlockSpec((nhid, nhid), lambda i: (0, 0)),   # W2
            pl.BlockSpec((1, nhid), lambda i: (0, 0)),      # b2
            pl.BlockSpec((nhid, nclass), lambda i: (0, 0)), # W3
            pl.BlockSpec((1, nclass), lambda i: (0, 0)),    # b3
        ],
        out_specs=pl.BlockSpec((tm, nclass), lambda i: (i, 0)),
        compiler_params=cparams,
    )(adj, dinv_col, dinv_row, h1, h1, params["w2"], params["b2"],
      params["w3"], params["b3"])
    return out


def cog_forward_ref(adj, x, params):
    """Pure-JAX reference (single degree vector, as in PyG gcn_norm)."""
    n = x.shape[0]
    a_hat = adj + jnp.eye(n, dtype=adj.dtype)
    dinv = jax.lax.rsqrt(jnp.sum(adj, axis=1) + 1.0)
    s = dinv[:, None] * a_hat * dinv[None, :]
    h1 = jax.nn.relu(s @ (x @ params["w1"]) + params["b1"])
    h2 = s @ (h1 @ params["w2"]) + params["b2"]
    logits = h2 @ params["w3"] + params["b3"]
    return jax.nn.log_softmax(logits, axis=1)


def init_params(key, nfeat, nhid, nclass):
    """Deterministic synthetic weights matching GCN(nfeat, nhid, nhid, nclass)."""
    ks = jax.random.split(key, 6)
    p = {
        # GCNConv(nfeat, nhid): weight (nfeat, nhid), bias (nhid,)
        "w1": 0.1 * jax.random.normal(ks[0], (nfeat, nhid), jnp.float32),
        "b1": 0.1 * jax.random.normal(ks[1], (1, nhid), jnp.float32),
        # GCNConv(nhid, nhid)
        "w2": 0.1 * jax.random.normal(ks[2], (nhid, nhid), jnp.float32),
        "b2": 0.1 * jax.random.normal(ks[3], (1, nhid), jnp.float32),
        # nn.Linear(nhid, nclass)
        "w3": 0.1 * jax.random.normal(ks[4], (nhid, nclass), jnp.float32),
        "b3": 0.1 * jax.random.normal(ks[5], (1, nclass), jnp.float32),
    }
    # TODO(synk): mask_embedding exists in GCN.__init__ but is unused in the eval
    # forward path (mask_nodes=None), so it is not materialized.
    return p


if __name__ == "__main__":
    key = jax.random.PRNGKey(0)
    k_adj, k_x, k_w = jax.random.split(key, 3)

    # Small but grid-exercising shapes (2 row tiles of 128).
    N, NFEAT, NHID, NCLASS = 256, 32, 64, 8
    TM = 128

    # Symmetric 0/1 adjacency with zero diagonal (typical graph adjacency for CoG).
    upper = (jax.random.uniform(k_adj, (N, N)) < 0.05).astype(jnp.float32)
    adj = jnp.triu(upper, k=1)
    adj = adj + adj.T

    x = jax.random.normal(k_x, (N, NFEAT), jnp.float32)
    params = init_params(k_w, NFEAT, NHID, NCLASS)

    ref = cog_forward_ref(adj, x, params)

    # f32 MXU path: tight check of the kernel structure / normalization.
    out_f32 = jax.block_until_ready(
        cog_forward(adj, x, params, tm=TM, matmul_dtype=jnp.float32))
    assert out_f32.shape == (N, NCLASS)
    assert jnp.allclose(out_f32, ref, atol=2e-3, rtol=2e-3), "f32 path mismatch"

    # bf16 MXU path (default, perf config): looser numerical tolerance.
    out_bf16 = jax.block_until_ready(
        cog_forward(adj, x, params, tm=TM, matmul_dtype=jnp.bfloat16))
    assert out_bf16.shape == (N, NCLASS)
    assert jnp.allclose(out_bf16, ref, atol=2e-2, rtol=2e-2), "bf16 path mismatch"

    print("KERNEL_OK")
</pallas_src>

<mosaic_0001>
module attributes {stable_mosaic.version = 11 : i64} {
  func.func @_dinv_kernel(%arg0: i32, %arg1: memref<128x256xf32, #tpu.memory_space<vmem>>, %arg2: memref<128x1xf32, #tpu.memory_space<vmem>>) attributes {dimension_semantics = [#tpu.dimension_semantics<parallel>], iteration_bounds = array<i64: 2>, scalar_prefetch = 0 : i64, scratch_operands = 0 : i64, tpu.core_type = #tpu.core_type<tc>, window_params = [{transform_indices = @transform_0, window_bounds = array<i64: 128, 256>}, {transform_indices = @transform_1, window_bounds = array<i64: 128, 1>}]} {
    %c0 = arith.constant 0 : index
    %c0_0 = arith.constant 0 : index
    %0 = vector.load %arg1[%c0, %c0_0] : memref<128x256xf32, #tpu.memory_space<vmem>>, vector<128x256xf32>
    %cst = arith.constant dense<0.000000e+00> : vector<128xf32>
    %1 = vector.multi_reduction <add>, %0, %cst [1] : vector<128x256xf32> to vector<128xf32>
    %2 = vector.shape_cast %1 : vector<128xf32> to vector<128x1xf32>
    %cst_1 = arith.constant 1.000000e+00 : f32
    %3 = vector.broadcast %cst_1 : f32 to vector<128x1xf32>
    %4 = arith.addf %2, %3 : vector<128x1xf32>
    %5 = math.rsqrt %4 : vector<128x1xf32>
    %c0_2 = arith.constant 0 : index
    %c0_3 = arith.constant 0 : index
    %6 = vector.load %arg2[%c0_2, %c0_3] : memref<128x1xf32, #tpu.memory_space<vmem>>, vector<128x1xf32>
    tpu.vector_store %arg2[%c0_2, %c0_3], %5 {strides = array<i32>} : memref<128x1xf32, #tpu.memory_space<vmem>>, vector<128x1xf32>,
    return
  }
  func.func @transform_0(%arg0: i32) -> (i32, i32) {
    %c0_i32 = arith.constant 0 : i32
    %c0_i32_0 = arith.constant 0 : i32
    return %arg0, %c0_i32 : i32, i32
  }
  func.func @transform_1(%arg0: i32) -> (i32, i32) {
    %c0_i32 = arith.constant 0 : i32
    %c0_i32_0 = arith.constant 0 : i32
    return %arg0, %c0_i32 : i32, i32
  }
}

</mosaic_0001>

<llo_original>
// kernel: tpu_custom_call.1
$region0: #{tpu_custom_call.1}
  #allocation0 [shape = 'u32[]', space=smem, size = 0x4, offset = 0x4, fixed_abs, tag = 'smem constant byte address 0x4 - core index']
  #allocation1 [shape = 'u32[144,128]{1,0:T(1,128)}', space=vmem, size = 0x12000, scoped, tag = 'internal scratch']
  %s0 = inlined_call_operand.hbm [shape: f32[256,256], index: 0, kind: input, shape index: {}]
  %s1 = inlined_call_operand.vmem [shape: f32[256,1], index: 1, kind: output, shape index: {}]
  %s2 = sld [smem:[#allocation0]]
  $region41: #{tpu_custom_call.1} parent=0
    _
  %s4 = ssub.s32 1, %s2
  %s5 = scalar_select 0, %s4, %s2
  $region1: #{tpu_custom_call.1} parent=0
    #allocation2 [shape = 'u8[262144]{0}', space=vmem, size = 0x40000, scoped, tag = 'input window, operand 0']
    #allocation3 [shape = 's32[2]{0}', space=sflag, size = 0x8, scoped, tag = 'scoped memory for tpu_custom_call.1']
    %6 = vsyncpa [#allocation3], 0
    %s7 = scalar_lea.sflag [#allocation3], 1
    %8 = vsyncpa %s7, 0
    loop: start=0, step=1, limit=4
    $region2: #{tpu_custom_call.1} parent=1 // loop_pre_header
      _
    $region3: #{tpu_custom_call.1} parent=1 // loop_header
      %s10 = sphi 0, %s14
      %p11 = scmp.ge.s32.totalorder %s10, 4
      %s20 = sphi 0, %s22
      %s23 = sphi 0, %s20
      %s24 = sphi 0, %s23
      %s40 = sphi 0, %s24
      %s46 = sphi 0, %s48
      %s49 = sphi 0, %s46
      %s50 = sphi 0, %s49
      %s66 = sphi 0, %s50
    $region4: #{tpu_custom_call.1} parent=1 // loop_header_branch
      %13 = sbr.rel (%p11) target = $region8
    $region5: #{tpu_custom_call.1} parent=1 // loop_body
      %s15 = ssub.s32 %s10, 1
      %s16 = ssub.s32 %s10, 2
      %s17 = sadd.s32 %s10, 1
      %s18 = ssub.s32 %s10, %s17
      %p19 = scmp.eq.s32.totalorder %s18, 0
      %s21 = sadd.s32 %s20, 1
      %s22 = scalar_select %p19, %s20, %s21
      %p25 = pneg %p19
      %p26 = scmp.eq.s32.totalorder %s10, 1
      %p27 = por %p25, %p26
      %p28 = scmp.ne.s32.totalorder %s20, %s23
      %p29 = scmp.eq.s32.totalorder %s10, 0
      %p30 = por %p28, %p29
      %p31 = scmp.ne.s32.totalorder %s20, %s23
      %p32 = scmp.eq.s32.totalorder %s15, 1
      %p33 = por %p31, %p32
      %p34 = scmp.ne.s32.totalorder %s23, %s24
      %p35 = scmp.eq.s32.totalorder %s15, 0
      %p36 = por %p34, %p35
      %p37 = scmp.ne.s32.totalorder %s23, %s24
      %p38 = scmp.eq.s32.totalorder %s16, 1
      %p39 = por %p37, %p38
      %p41 = scmp.ne.s32.totalorder %s24, %s40
      %p42 = scmp.eq.s32.totalorder %s16, 0
      %p43 = por %p41, %p42
      %s44 = ssub.s32 %s10, %s17
      %p45 = scmp.eq.s32.totalorder %s44, 0
      %s47 = sadd.s32 %s46, 1
      %s48 = scalar_select %p45, %s46, %s47
      %p51 = pneg %p45
      %p52 = scmp.eq.s32.totalorder %s10, 1
      %p53 = por %p51, %p52
      %p54 = scmp.ne.s32.totalorder %s46, %s49
      %p55 = scmp.eq.s32.totalorder %s10, 0
      %p56 = por %p54, %p55
      %p57 = scmp.ne.s32.totalorder %s46, %s49
      %p58 = scmp.eq.s32.totalorder %s15, 1
      %p59 = por %p57, %p58
      %p60 = scmp.ne.s32.totalorder %s49, %s50
      %p61 = scmp.eq.s32.totalorder %s15, 0
      %p62 = por %p60, %p61
      %p63 = scmp.ne.s32.totalorder %s49, %s50
      %p64 = scmp.eq.s32.totalorder %s16, 1
      %p65 = por %p63, %p64
      %p67 = scmp.ne.s32.totalorder %s50, %s66
      %p68 = scmp.eq.s32.totalorder %s16, 0
      %p69 = por %p67, %p68
      %p70 = scmp.le.s32.totalorder 1, %s10
      %p71 = scmp.lt.s32.totalorder %s10, 3
      %p72 = pnand %p70, %p71
      %p73 = pneg %p72
      // Predicated region
      $region9: #{tpu_custom_call.1} parent=5 // pred_check
        _
      $region10: #{tpu_custom_call.1} parent=5 // pred_check_branch
        %75 = sbr.rel (%p72) target = $region12
      $region11: #{tpu_custom_call.1} parent=5 // pred_region
        %s76 = ssub.s32 %s10, 1
      $region12: #{tpu_custom_call.1} parent=5 // pred_fallthru
        _
      %p77 = scmp.lt.s32.totalorder %s10, 2
      // Predicated region
      $region13: #{tpu_custom_call.1} parent=5 // pred_check
        %p78 = pneg %p77
      $region14: #{tpu_custom_call.1} parent=5 // pred_check_branch
        %80 = sbr.rel (%p78) target = $region16
      $region15: #{tpu_custom_call.1} parent=5 // pred_region
        // Predicated region
        $region17: #{tpu_custom_call.1} parent=15 // pred_check
          %p81 = pneg %p30
        $region18: #{tpu_custom_call.1} parent=15 // pred_check_branch
          %83 = sbr.rel (%p81) target = $region20
        $region19: #{tpu_custom_call.1} parent=15 // pred_region
          %s84 = sand.u32 %s20, 1
          %s85 = scalar_lea.sflag [#allocation3], %s84
          %s86 = sand.u32 %s20, 1
          %s87 = smul.addr %s86, 256
          %s88 = scalar_lea.vmem [#allocation2], %s87
          %s89 = smul.u32 16, %s10
          %s91 = ssub.s32 4096, 4096
          %92 = vsyncadd %s85, %s91
          %s93 = smul.addr %s89, 2
          %s94 = smul.addr %s93, 128
          %s95 = scalar_lea.hbm %s0, %s94
          %s96 = sshll.u32 %s88, 4
          %s97 = int_to_ptr.vmem [resolvable:$true] %s96
          %102 = dma.hbm_to_vmem [thread:$0]  %s95, 4096, %s97, %s85, 256, 256, 16
        $region20: #{tpu_custom_call.1} parent=15 // pred_fallthru
          _
      $region16: #{tpu_custom_call.1} parent=5 // pred_fallthru
        _
      %p103 = scmp.le.s32.totalorder 1, %s10
      %p104 = scmp.lt.s32.totalorder %s10, 3
      %p105 = pnand %p103, %p104
      %p106 = pneg %p105
      // Predicated region
      $region21: #{tpu_custom_call.1} parent=5 // pred_check
        _
      $region22: #{tpu_custom_call.1} parent=5 // pred_check_branch
        %108 = sbr.rel (%p105) target = $region24
      $region23: #{tpu_custom_call.1} parent=5 // pred_region
        %s109 = ssub.s32 %s10, 1
        %s110 = sand.u32 %s23, 1
        %s111 = scalar_lea.sflag [#allocation3], %s110
        %s112 = sand.u32 %s23, 1
        %s113 = smul.addr %s112, 256
        %s114 = scalar_lea.vmem [#allocation2], %s113
        // Predicated region
        $region25: #{tpu_custom_call.1} parent=23 // pred_check
          %p115 = pneg %p36
        $region26: #{tpu_custom_call.1} parent=23 // pred_check_branch
          %117 = sbr.rel (%p115) target = $region28
        $region27: #{tpu_custom_call.1} parent=23 // pred_region
          %118 = dma.done %s111, 4096
        $region28: #{tpu_custom_call.1} parent=23 // pred_fallthru
          _
        %s119 = sand.u32 %s23, 1
        %s120 = scalar_lea.sflag [#allocation3], %s119
        %s121 = sand.u32 %s23, 1
        %s122 = smul.addr %s121, 256
        %s123 = scalar_lea.vmem [#allocation2], %s122
        %p124 = pneg %p36
        %p125 = pneg %p33
        %p126 = pneg %p62
        %p127 = pneg %p59
        %s128 = smul.u32 16, %s15
        %p129 = scmp.lt.s32.totalorder %s128, 31
        %s130 = scalar_select %p129, %s128, 31
        %s131 = smul.addr %s130, 8
        %s132 = scalar_lea.vmem %s1, %s131
        %s133 = smul.u32 16, %s15
        %s134 = smul.u32 16, %s15
        %p135 = scmp.lt.s32.totalorder %s134, 31
        %s136 = scalar_select %p135, %s134, 31
        %s137 = smul.addr %s136, 8
        %s138 = scalar_lea.vmem %s1, %s137
        %s139 = smul.u32 16, %s15
        %v140 = vld [vmem:[%s114] sm:$0xff]
        %v141 = vld [vmem:[%s114 + $0x8] sm:$0xff]
        %v142 = vld [vmem:[%s114 + $0x10] sm:$0xff]
        %v143 = vld [vmem:[%s114 + $0x18] sm:$0xff]
        %v144 = vld [vmem:[%s114 + $0x20] sm:$0xff]
        %v145 = vld [vmem:[%s114 + $0x28] sm:$0xff]
        %v146 = vld [vmem:[%s114 + $0x30] sm:$0xff]
        %v147 = vld [vmem:[%s114 + $0x38] sm:$0xff]
        %v148 = vld [vmem:[%s114 + $0x40] sm:$0xff]
        %v149 = vld [vmem:[%s114 + $0x48] sm:$0xff]
        %v150 = vld [vmem:[%s114 + $0x50] sm:$0xff]
        %v151 = vld [vmem:[%s114 + $0x58] sm:$0xff]
        %v152 = vld [vmem:[%s114 + $0x60] sm:$0xff]
        %v153 = vld [vmem:[%s114 + $0x68] sm:$0xff]
        %v154 = vld [vmem:[%s114 + $0x70] sm:$0xff]
        %v155 = vld [vmem:[%s114 + $0x78] sm:$0xff]
        %v156 = vld [vmem:[%s114 + $0x80] sm:$0xff]
        %v157 = vld [vmem:[%s114 + $0x88] sm:$0xff]
        %v158 = vld [vmem:[%s114 + $0x90] sm:$0xff]
        %v159 = vld [vmem:[%s114 + $0x98] sm:$0xff]
        %v160 = vld [vmem:[%s114 + $0xa0] sm:$0xff]
        %v161 = vld [vmem:[%s114 + $0xa8] sm:$0xff]
        %v162 = vld [vmem:[%s114 + $0xb0] sm:$0xff]
        %v163 = vld [vmem:[%s114 + $0xb8] sm:$0xff]
        %v164 = vld [vmem:[%s114 + $0xc0] sm:$0xff]
        %v165 = vld [vmem:[%s114 + $0xc8] sm:$0xff]
        %v166 = vld [vmem:[%s114 + $0xd0] sm:$0xff]
        %v167 = vld [vmem:[%s114 + $0xd8] sm:$0xff]
        %v168 = vld [vmem:[%s114 + $0xe0] sm:$0xff]
        %v169 = vld [vmem:[%s114 + $0xe8] sm:$0xff]
        %v170 = vld [vmem:[%s114 + $0xf0] sm:$0xff]
        %v171 = vld [vmem:[%s114 + $0xf8] sm:$0xff]
        %v172 = vadd.f32 %v140, %v141
        %173 = vadd.xlane.f32.xlu0 %v172
        %v174 = vpop.xlane.xlu0 %173
        %v175 = vadd.f32 %v142, %v143
        %176 = vadd.xlane.f32.xlu0 %v175
        %v177 = vpop.xlane.xlu0 %176
        %v178 = vadd.f32 %v144, %v145
        %179 = vadd.xlane.f32.xlu0 %v178
        %v180 = vpop.xlane.xlu0 %179
        %v181 = vadd.f32 %v146, %v147
        %182 = vadd.xlane.f32.xlu0 %v181
        %v183 = vpop.xlane.xlu0 %182
        %v184 = vadd.f32 %v148, %v149
        %185 = vadd.xlane.f32.xlu0 %v184
        %v186 = vpop.xlane.xlu0 %185
        %v187 = vadd.f32 %v150, %v151
        %188 = vadd.xlane.f32.xlu0 %v187
        %v189 = vpop.xlane.xlu0 %188
        %v190 = vadd.f32 %v152, %v153
        %191 = vadd.xlane.f32.xlu0 %v190
        %v192 = vpop.xlane.xlu0 %191
        %v193 = vadd.f32 %v154, %v155
        %194 = vadd.xlane.f32.xlu0 %v193
        %v195 = vpop.xlane.xlu0 %194
        %v196 = vadd.f32 %v156, %v157
        %197 = vadd.xlane.f32.xlu0 %v196
        %v198 = vpop.xlane.xlu0 %197
        %v199 = vadd.f32 %v158, %v159
        %200 = vadd.xlane.f32.xlu0 %v199
        %v201 = vpop.xlane.xlu0 %200
        %v202 = vadd.f32 %v160, %v161
        %203 = vadd.xlane.f32.xlu0 %v202
        %v204 = vpop.xlane.xlu0 %203
        %v205 = vadd.f32 %v162, %v163
        %206 = vadd.xlane.f32.xlu0 %v205
        %v207 = vpop.xlane.xlu0 %206
        %v208 = vadd.f32 %v164, %v165
        %209 = vadd.xlane.f32.xlu0 %v208
        %v210 = vpop.xlane.xlu0 %209
        %v211 = vadd.f32 %v166, %v167
        %212 = vadd.xlane.f32.xlu0 %v211
        %v213 = vpop.xlane.xlu0 %212
        %v214 = vadd.f32 %v168, %v169
        %215 = vadd.xlane.f32.xlu0 %v214
        %v216 = vpop.xlane.xlu0 %215
        %v217 = vadd.f32 %v170, %v171
        %218 = vadd.xlane.f32.xlu0 %v217
        %v219 = vpop.xlane.xlu0 %218
        %v220 = vadd.f32 %v174, 1.0
        %v221 = vadd.f32 %v177, 1.0
        %v222 = vadd.f32 %v180, 1.0
        %v223 = vadd.f32 %v183, 1.0
        %v224 = vadd.f32 %v186, 1.0
        %v225 = vadd.f32 %v189, 1.0
        %v226 = vadd.f32 %v192, 1.0
        %v227 = vadd.f32 %v195, 1.0
        %v228 = vadd.f32 %v198, 1.0
        %v229 = vadd.f32 %v201, 1.0
        %v230 = vadd.f32 %v204, 1.0
        %v231 = vadd.f32 %v207, 1.0
        %v232 = vadd.f32 %v210, 1.0
        %v233 = vadd.f32 %v213, 1.0
        %v234 = vadd.f32 %v216, 1.0
        %v235 = vadd.f32 %v219, 1.0
        %v236 = vrsqrt.pop %v220
        %v237 = vrsqrt.pop %v221
        %v238 = vrsqrt.pop %v222
        %v239 = vrsqrt.pop %v223
        %v240 = vrsqrt.pop %v224
        %v241 = vrsqrt.pop %v225
        %v242 = vrsqrt.pop %v226
        %v243 = vrsqrt.pop %v227
        %v244 = vrsqrt.pop %v228
        %v245 = vrsqrt.pop %v229
        %v246 = vrsqrt.pop %v230
        %v247 = vrsqrt.pop %v231
        %v248 = vrsqrt.pop %v232
        %v249 = vrsqrt.pop %v233
        %v250 = vrsqrt.pop %v234
        %v251 = vrsqrt.pop %v235
        %vm252 = vcmask 7168
        %253 = vst.msk [vmem:[%s138] sm:$0xff] %vm252, %v236
        %254 = vst.msk [vmem:[%s138 + $0x8] sm:$0xff] %vm252, %v237
        %255 = vst.msk [vmem:[%s138 + $0x10] sm:$0xff] %vm252, %v238
        %256 = vst.msk [vmem:[%s138 + $0x18] sm:$0xff] %vm252, %v239
        %257 = vst.msk [vmem:[%s138 + $0x20] sm:$0xff] %vm252, %v240
        %258 = vst.msk [vmem:[%s138 + $0x28] sm:$0xff] %vm252, %v241
        %259 = vst.msk [vmem:[%s138 + $0x30] sm:$0xff] %vm252, %v242
        %260 = vst.msk [vmem:[%s138 + $0x38] sm:$0xff] %vm252, %v243
        %261 = vst.msk [vmem:[%s138 + $0x40] sm:$0xff] %vm252, %v244
        %262 = vst.msk [vmem:[%s138 + $0x48] sm:$0xff] %vm252, %v245
        %263 = vst.msk [vmem:[%s138 + $0x50] sm:$0xff] %vm252, %v246
        %264 = vst.msk [vmem:[%s138 + $0x58] sm:$0xff] %vm252, %v247
        %265 = vst.msk [vmem:[%s138 + $0x60] sm:$0xff] %vm252, %v248
        %266 = vst.msk [vmem:[%s138 + $0x68] sm:$0xff] %vm252, %v249
        %267 = vst.msk [vmem:[%s138 + $0x70] sm:$0xff] %vm252, %v250
        %268 = vst.msk [vmem:[%s138 + $0x78] sm:$0xff] %vm252, %v251
        %s269 = smul.u32 16, %s15
        %p270 = scmp.lt.s32.totalorder %s269, 31
        %s271 = scalar_select %p270, %s269, 31
        %s272 = smul.addr %s271, 8
        %s273 = scalar_lea.vmem %s1, %s272
        // Predicated region
        $region29: #{tpu_custom_call.1} parent=23 // pred_check
          %p274 = pneg %p59
        $region30: #{tpu_custom_call.1} parent=23 // pred_check_branch
          %276 = sbr.rel (%p274) target = $region32
        $region31: #{tpu_custom_call.1} parent=23 // pred_region
          %s277 = smul.u32 16, %s15
        $region32: #{tpu_custom_call.1} parent=23 // pred_fallthru
          _
      $region24: #{tpu_custom_call.1} parent=5 // pred_fallthru
        _
      %p278 = scmp.le.s32.totalorder 2, %s10
      // Predicated region
      $region33: #{tpu_custom_call.1} parent=5 // pred_check
        %p279 = pneg %p278
      $region34: #{tpu_custom_call.1} parent=5 // pred_check_branch
        %281 = sbr.rel (%p279) target = $region36
      $region35: #{tpu_custom_call.1} parent=5 // pred_region
        %s282 = ssub.s32 %s10, 2
        // Predicated region
        $region37: #{tpu_custom_call.1} parent=35 // pred_check
          %p283 = pneg %p65
        $region38: #{tpu_custom_call.1} parent=35 // pred_check_branch
          %285 = sbr.rel (%p283) target = $region40
        $region39: #{tpu_custom_call.1} parent=35 // pred_region
          %s286 = smul.u32 16, %s16
          %p287 = scmp.lt.s32.totalorder %s286, 31
          %s288 = scalar_select %p287, %s286, 31
          %s289 = smul.addr %s288, 8
          %s290 = scalar_lea.vmem %s1, %s289
        $region40: #{tpu_custom_call.1} parent=35 // pred_fallthru
          _
      $region36: #{tpu_custom_call.1} parent=5 // pred_fallthru
        _
    $region6: #{tpu_custom_call.1} parent=1 // loop_footer
      %s14 = sadd.s32 1, %s10
    $region7: #{tpu_custom_call.1} parent=1 // loop_footer_branch
      %9 = sbr.rel target = $region3
    $region8: #{tpu_custom_call.1} parent=1 // loop_exit
      _
    %291 = vsyncpa [#allocation3], 1
    %s292 = scalar_lea.sflag [#allocation3], 1
    %293 = vsyncpa %s292, 1

</llo_original>
